<compile_context>
chip_gen: v7x
topology: tpu7x:2x2x1
jax: 0.10.0
libtpu: 0.0.40
codegen_flags: <defaults>
</compile_context>

<pallas_src>
import math
from functools import reduce
from operator import mul

import jax
import jax.numpy as jnp
from jax.experimental import pallas as pl
from jax.experimental.pallas import tpu as pltpu


# ----------------------------------------------------------------------------
# Per-generation VMEM budgeting.
# ----------------------------------------------------------------------------
def _pad8(n):
    return ((n + 7) // 8) * 8


def _pad128(n):
    return ((n + 127) // 128) * 128


def _vmem_capacity_bytes():
    """Physical VMEM of the current TPU generation (fallback: v7x's 64 MiB)."""
    try:
        return int(pltpu.get_tpu_info().vmem_capacity_bytes)
    except Exception:  # non-TPU backend / older Pallas build
        return 64 * 1024 * 1024


def _vmem_limit_for(used_bytes, capacity):
    """Scoped-VMEM limit: what we use + headroom, clamped below physical."""
    lo = 16 * 1024 * 1024
    hi = capacity - 8 * 1024 * 1024
    return int(min(max(used_bytes + 8 * 1024 * 1024, lo), hi))


def _ctx_stage_blocking(n_cls, n_ctx, ctx_dim, itemsize, capacity):
    """Block of classes whose broadcast-ctx stage fits a per-generation budget.

    Uses cdiv-style ragged blocking (full blocks + one tail block), so prime /
    odd class counts do not collapse to block_cls == 1.
    """
    per_class = itemsize * _pad8(n_ctx) * _pad128(ctx_dim)
    stage_budget = max(4 * 1024 * 1024, capacity // 4)  # 32 MiB on 128 MiB parts
    block_cls = max(1, min(n_cls, stage_budget // per_class))
    stage_bytes = block_cls * per_class
    return block_cls, stage_bytes


# ----------------------------------------------------------------------------
# Path 1: in-place ctx scatter into the pre-built embedding (aliased output).
# ----------------------------------------------------------------------------
def _make_inplace_shared_kernel(n_cls, n_ctx, block_cls):
    num_full = n_cls // block_cls
    rem = n_cls % block_cls

    def kernel(ctx_ref, emb_ref, out_ref, ctx_stage, sem):
        # emb_ref is the same HBM buffer as out_ref (input_output_aliases); it
        # is never read -- it only exists to establish the alias.
        del emb_ref
        # Stage the broadcast of the shared context once (single grid step).
        ctx_stage[...] = jnp.broadcast_to(ctx_ref[...], ctx_stage.shape)

        def scatter(block_idx, size):
            return pltpu.make_async_copy(
                ctx_stage.at[pl.ds(0, size)],
                out_ref.at[pl.ds(block_idx * block_cls, size),
                           pl.ds(1, n_ctx), :],
                sem,
            )

        copies = [scatter(b, block_cls) for b in range(num_full)]
        if rem:
            copies.append(scatter(num_full, rem))
        # Issue every scatter DMA back-to-back (fully overlapped), then drain.
        # Prefix / suffix rows of the aliased output are never touched.
        for cp in copies:
            cp.start()
        for cp in copies:
            cp.wait()

    return kernel


def _make_inplace_csc_kernel(n_cls, n_ctx):
    def kernel(ctx_ref, emb_ref, out_ref, sem):
        del emb_ref
        # ctx stays in HBM: one strided HBM->HBM DMA scatters every class's
        # context rows (contiguous source, seq_len*D-strided destination).
        cp = pltpu.make_async_copy(
            ctx_ref,
            out_ref.at[pl.ds(0, n_cls), pl.ds(1, n_ctx), :],
            sem,
        )
        cp.start()
        cp.wait()

    return kernel


def prompt_learner_forward_inplace(ctx, token_embedding):
    """PromptLearner.forward() (position='end') via in-place ctx scatter.

    ctx             : (n_ctx, D) generic context or (n_cls, n_ctx, D) CSC.
    token_embedding : (n_cls, seq_len, D) frozen CLIP embedding of the full
                      tokenized prompts.  Its buffer is aliased to the output;
                      only the ctx rows are written.  For the alias to avoid a
                      defensive whole-table copy, callers should donate it
                      (e.g. jax.jit(..., donate_argnums=...) or pass a
                      temporary with no other live reference).
    returns         : (n_cls, seq_len, D) prompts.
    """
    n_cls, seq_len, ctx_dim = token_embedding.shape
    dtype = token_embedding.dtype
    itemsize = jnp.dtype(dtype).itemsize
    capacity = _vmem_capacity_bytes()

    shared_ctx = ctx.ndim == 2
    n_ctx = ctx.shape[0] if shared_ctx else ctx.shape[1]
    assert 1 + n_ctx <= seq_len

    if shared_ctx:
        ctx_op = ctx.reshape(1, n_ctx, ctx_dim).astype(dtype)
        block_cls, stage_bytes = _ctx_stage_blocking(
            n_cls, n_ctx, ctx_dim, itemsize, capacity)
        kernel = _make_inplace_shared_kernel(n_cls, n_ctx, block_cls)
        in_specs = [
            pl.BlockSpec((1, n_ctx, ctx_dim), lambda i: (0, 0, 0)),  # VMEM, once
            pl.BlockSpec(memory_space=pl.ANY),                       # embedding stays in HBM
        ]
        scratch_shapes = [
            pltpu.VMEM((block_cls, n_ctx, ctx_dim), dtype),
            pltpu.SemaphoreType.DMA(()),
        ]
    else:
        # CSC: no VMEM staging at all -- a single strided HBM->HBM DMA.
        ctx_op = ctx.astype(dtype)
        stage_bytes = 0
        kernel = _make_inplace_csc_kernel(n_cls, n_ctx)
        in_specs = [
            pl.BlockSpec(memory_space=pl.ANY),
            pl.BlockSpec(memory_space=pl.ANY),
        ]
        scratch_shapes = [pltpu.SemaphoreType.DMA(())]

    return pl.pallas_call(
        kernel,
        out_shape=jax.ShapeDtypeStruct((n_cls, seq_len, ctx_dim), dtype),
        grid_spec=pltpu.PrefetchScalarGridSpec(
            num_scalar_prefetch=0,
            grid=(1,),
            in_specs=in_specs,
            out_specs=pl.BlockSpec(memory_space=pl.ANY),
            scratch_shapes=scratch_shapes,
        ),
        input_output_aliases={1: 0},  # embedding buffer becomes the output
        compiler_params=pltpu.CompilerParams(
            dimension_semantics=("arbitrary",),
            vmem_limit_bytes=_vmem_limit_for(stage_bytes, capacity),
        ),
    )(ctx_op, token_embedding)


# ----------------------------------------------------------------------------
# Path 2: signature-faithful concat (prefix + ctx + suffix), pure DMA assembly.
# ----------------------------------------------------------------------------
def _make_concat_shared_kernel(n_cls, n_ctx, n_suffix, block_cls):
    num_full = n_cls // block_cls
    rem = n_cls % block_cls

    def kernel(prefix_ref, ctx_ref, suffix_ref, out_ref, ctx_stage, sems):
        # prefix / suffix / out all live in HBM: the output is assembled purely
        # with DMAs -- no masked / sublane-misaligned vector stores.
        pre_cp = pltpu.make_async_copy(
            prefix_ref, out_ref.at[pl.ds(0, n_cls), pl.ds(0, 1), :], sems.at[0])
        suf_cp = pltpu.make_async_copy(
            suffix_ref,
            out_ref.at[pl.ds(0, n_cls), pl.ds(1 + n_ctx, n_suffix), :],
            sems.at[1])
        pre_cp.start()
        suf_cp.start()

        # Broadcast the shared ctx in VMEM while the prefix/suffix DMAs fly.
        ctx_stage[...] = jnp.broadcast_to(ctx_ref[...], ctx_stage.shape)

        def scatter(block_idx, size):
            return pltpu.make_async_copy(
                ctx_stage.at[pl.ds(0, size)],
                out_ref.at[pl.ds(block_idx * block_cls, size),
                           pl.ds(1, n_ctx), :],
                sems.at[2],
            )

        copies = [scatter(b, block_cls) for b in range(num_full)]
        if rem:
            copies.append(scatter(num_full, rem))
        for cp in copies:
            cp.start()

        pre_cp.wait()
        suf_cp.wait()
        for cp in copies:
            cp.wait()

    return kernel


def _make_concat_csc_kernel(n_cls, n_ctx, n_suffix):
    def kernel(prefix_ref, ctx_ref, suffix_ref, out_ref, sems):
        # Three independent strided HBM->HBM DMAs into disjoint output windows.
        pre_cp = pltpu.make_async_copy(
            prefix_ref, out_ref.at[pl.ds(0, n_cls), pl.ds(0, 1), :], sems.at[0])
        ctx_cp = pltpu.make_async_copy(
            ctx_ref, out_ref.at[pl.ds(0, n_cls), pl.ds(1, n_ctx), :], sems.at[1])
        suf_cp = pltpu.make_async_copy(
            suffix_ref,
            out_ref.at[pl.ds(0, n_cls), pl.ds(1 + n_ctx, n_suffix), :],
            sems.at[2])
        pre_cp.start()
        ctx_cp.start()
        suf_cp.start()
        pre_cp.wait()
        ctx_cp.wait()
        suf_cp.wait()

    return kernel


def prompt_learner_forward(ctx, token_prefix, token_suffix):
    """PromptLearner.forward() (position='end') as a DMA-assembled concat.

    ctx          : (n_ctx, D) generic context or (n_cls, n_ctx, D) CSC.
    token_prefix : (n_cls, 1, D)
    token_suffix : (n_cls, n_suffix, D)
    returns      : (n_cls, 1 + n_ctx + n_suffix, D)
    """
    n_cls, n_prefix, ctx_dim = token_prefix.shape
    assert n_prefix == 1
    n_suffix = token_suffix.shape[1]
    dtype = token_prefix.dtype
    itemsize = jnp.dtype(dtype).itemsize
    capacity = _vmem_capacity_bytes()

    shared_ctx = ctx.ndim == 2
    n_ctx = ctx.shape[0] if shared_ctx else ctx.shape[1]
    seq_len = 1 + n_ctx + n_suffix

    if shared_ctx:
        ctx_op = ctx.reshape(1, n_ctx, ctx_dim).astype(dtype)
        block_cls, stage_bytes = _ctx_stage_blocking(
            n_cls, n_ctx, ctx_dim, itemsize, capacity)
        kernel = _make_concat_shared_kernel(n_cls, n_ctx, n_suffix, block_cls)
        in_specs = [
            pl.BlockSpec(memory_space=pl.ANY),                        # prefix in HBM
            pl.BlockSpec((1, n_ctx, ctx_dim), lambda i: (0, 0, 0)),   # ctx in VMEM
            pl.BlockSpec(memory_space=pl.ANY),                        # suffix in HBM
        ]
        scratch_shapes = [
            pltpu.VMEM((block_cls, n_ctx, ctx_dim), dtype),
            pltpu.SemaphoreType.DMA((3,)),
        ]
    else:
        ctx_op = ctx.astype(dtype)
        stage_bytes = 0
        kernel = _make_concat_csc_kernel(n_cls, n_ctx, n_suffix)
        in_specs = [pl.BlockSpec(memory_space=pl.ANY)] * 3
        scratch_shapes = [pltpu.SemaphoreType.DMA((3,))]

    return pl.pallas_call(
        kernel,
        out_shape=jax.ShapeDtypeStruct((n_cls, seq_len, ctx_dim), dtype),
        grid_spec=pltpu.PrefetchScalarGridSpec(
            num_scalar_prefetch=0,
            grid=(1,),
            in_specs=in_specs,
            out_specs=pl.BlockSpec(memory_space=pl.ANY),
            scratch_shapes=scratch_shapes,
        ),
        compiler_params=pltpu.CompilerParams(
            dimension_semantics=("arbitrary",),
            vmem_limit_bytes=_vmem_limit_for(stage_bytes, capacity),
        ),
    )(token_prefix, ctx_op, token_suffix)


if __name__ == "__main__":
    # Small, deterministic synthetic shapes consistent with the module.
    n_cls, n_ctx, ctx_dim, seq_len = 4, 8, 128, 16
    n_suffix = seq_len - 1 - n_ctx
    num_tokens, prompt_dim, total_d_layer = 8, 768, 11

    key = jax.random.PRNGKey(0)
    k_ctx, k_csc, k_emb, k_prompt, k_deep = jax.random.split(key, 5)

    # nn.init.normal_(ctx_vectors, std=0.02): generic and class-specific ctx.
    ctx = (0.02 * jax.random.normal(k_ctx, (n_ctx, ctx_dim))).astype(jnp.float32)
    ctx_csc = (0.02 * jax.random.normal(k_csc, (n_cls, n_ctx, ctx_dim))).astype(jnp.float32)

    # Synthetic frozen CLIP embedding of the full tokenized prompts; __init__
    # slices token_prefix / token_suffix from exactly this tensor.
    embedding = jax.random.normal(k_emb, (n_cls, seq_len, ctx_dim)).astype(jnp.float32)
    token_prefix = embedding[:, :1, :]            # SOS
    token_suffix = embedding[:, 1 + n_ctx:, :]    # class tokens, EOS, padding

    # Parameters defined in __init__ but unused by forward() (VPT embeddings),
    # initialized only for shape parity with the module.
    val = math.sqrt(6.0 / float(3 * reduce(mul, (16, 16), 1) + prompt_dim))
    prompt_embeddings = jax.random.uniform(
        k_prompt, (1, num_tokens, prompt_dim), minval=-val, maxval=val)
    deep_prompt_embeddings = jax.random.uniform(
        k_deep, (total_d_layer, num_tokens, prompt_dim), minval=-val, maxval=val)

    # Plain-JAX references (computed before any aliased / donating kernel call).
    ref_generic = jnp.concatenate(
        [token_prefix, jnp.broadcast_to(ctx[None], (n_cls, n_ctx, ctx_dim)), token_suffix],
        axis=1)
    ref_csc = jnp.concatenate([token_prefix, ctx_csc, token_suffix], axis=1)

    # 1) in-place / aliased path.  Donate the embedding buffer so the alias is
    #    honored without a defensive copy; fresh temporaries are passed so the
    #    original `embedding` array stays valid.
    inplace_donating = jax.jit(prompt_learner_forward_inplace, donate_argnums=(1,))
    out_a = jax.block_until_ready(inplace_donating(ctx, embedding + 0.0))
    out_b = jax.block_until_ready(inplace_donating(ctx_csc, embedding + 0.0))

    # 2) signature-faithful concat path (pure DMA assembly).
    out_c = jax.block_until_ready(prompt_learner_forward(ctx, token_prefix, token_suffix))
    out_d = jax.block_until_ready(prompt_learner_forward(ctx_csc, token_prefix, token_suffix))

    for out, ref in ((out_a, ref_generic), (out_b, ref_csc),
                     (out_c, ref_generic), (out_d, ref_csc)):
        assert out.shape == (n_cls, seq_len, ctx_dim)
        assert jnp.array_equal(out, ref), "Pallas output mismatch vs reference"

    print("KERNEL_OK")
</pallas_src>

<mosaic_0001>
module attributes {stable_mosaic.version = 11 : i64} {
  func.func @kernel(%arg0: i32, %arg1: memref<1x8x128xf32, #tpu.memory_space<vmem>>, %arg2: memref<4x16x128xf32, #tpu.memory_space<any>>, %arg3: memref<4x16x128xf32, #tpu.memory_space<any>>, %arg4: memref<4x8x128xf32, #tpu.memory_space<vmem>>, %arg5: memref<!tpu.dma_semaphore, #tpu.memory_space<semaphore_mem>>) attributes {dimension_semantics = [#tpu.dimension_semantics<arbitrary>], iteration_bounds = array<i64: 1>, scalar_prefetch = 0 : i64, scratch_operands = 2 : i64, tpu.core_type = #tpu.core_type<tc>, window_params = [{pipeline_mode = #tpu.pipeline_mode<synchronous>, transform_indices = @transform_0, window_bounds = array<i64: 1, 8, 128>}, {}, {}]} {
    %c0 = arith.constant 0 : index
    %c0_0 = arith.constant 0 : index
    %c0_1 = arith.constant 0 : index
    %0 = vector.load %arg1[%c0, %c0_0, %c0_1] : memref<1x8x128xf32, #tpu.memory_space<vmem>>, vector<1x8x128xf32>
    %1 = vector.shape_cast %0 : vector<1x8x128xf32> to vector<1x8x128xf32>
    %2 = vector.broadcast %1 : vector<1x8x128xf32> to vector<4x8x128xf32>
    %c0_2 = arith.constant 0 : index
    %c0_3 = arith.constant 0 : index
    %c0_4 = arith.constant 0 : index
    %3 = vector.load %arg4[%c0_2, %c0_3, %c0_4] : memref<4x8x128xf32, #tpu.memory_space<vmem>>, vector<4x8x128xf32>
    tpu.vector_store %arg4[%c0_2, %c0_3, %c0_4], %2 {strides = array<i32>} : memref<4x8x128xf32, #tpu.memory_space<vmem>>, vector<4x8x128xf32>,
    %c0_i32 = arith.constant 0 : i32
    %c0_i32_5 = arith.constant 0 : i32
    %c0_i32_6 = arith.constant 0 : i32
    %4 = tpu.memref_slice %arg4[%c0_i32, %c0_i32_5, %c0_i32_6] : memref<4x8x128xf32, #tpu.memory_space<vmem>> -> memref<4x8x128xf32, #tpu.memory_space<vmem>>
    %c0_i32_7 = arith.constant 0 : i32
    %c1_i32 = arith.constant 1 : i32
    %c0_i32_8 = arith.constant 0 : i32
    %5 = tpu.memref_slice %arg3[%c0_i32_7, %c1_i32, %c0_i32_8] : memref<4x16x128xf32, #tpu.memory_space<any>> -> memref<4x8x128xf32, #tpu.memory_space<any>>
    tpu.enqueue_dma source(%4 : memref<4x8x128xf32, #tpu.memory_space<vmem>>) target(%5 : memref<4x8x128xf32, #tpu.memory_space<any>>) target_semaphore(%arg5 : memref<!tpu.dma_semaphore, #tpu.memory_space<semaphore_mem>>)
    %c0_i32_9 = arith.constant 0 : i32
    %c0_i32_10 = arith.constant 0 : i32
    %c0_i32_11 = arith.constant 0 : i32
    %6 = tpu.memref_slice %arg4[%c0_i32_9, %c0_i32_10, %c0_i32_11] : memref<4x8x128xf32, #tpu.memory_space<vmem>> -> memref<4x8x128xf32, #tpu.memory_space<vmem>>
    %c0_i32_12 = arith.constant 0 : i32
    %c1_i32_13 = arith.constant 1 : i32
    %c0_i32_14 = arith.constant 0 : i32
    %7 = tpu.memref_slice %arg3[%c0_i32_12, %c1_i32_13, %c0_i32_14] : memref<4x16x128xf32, #tpu.memory_space<any>> -> memref<4x8x128xf32, #tpu.memory_space<any>>
    tpu.wait_dma2 semaphore(%arg5 : memref<!tpu.dma_semaphore, #tpu.memory_space<semaphore_mem>>) src(%6 : memref<4x8x128xf32, #tpu.memory_space<vmem>>) dst(%7 : memref<4x8x128xf32, #tpu.memory_space<any>>)
    return
  }
  func.func @transform_0(%arg0: i32) -> (i32, i32, i32) {
    %c0_i32 = arith.constant 0 : i32
    %c0_i32_0 = arith.constant 0 : i32
    %c0_i32_1 = arith.constant 0 : i32
    %c0_i32_2 = arith.constant 0 : i32
    return %c0_i32, %c0_i32_0, %c0_i32_1 : i32, i32, i32
  }
}

</mosaic_0001>

<llo_original>
// kernel: prompt_learner_forward_inplace.1
$region0: #{prompt_learner_forward_inplace.1}
  #allocation0 [shape = 'u32[]', space=smem, size = 0x4, offset = 0x4, fixed_abs, tag = 'smem constant byte address 0x4 - core index']
  #allocation1 [shape = 'u32[144,128]{1,0:T(1,128)}', space=vmem, size = 0x12000, scoped, tag = 'internal scratch']
  #allocation2 [shape = 'f32[4,8,128]{2,1,0:T(8,128)}', space=vmem, size = 0x4000, scoped, tag = 'scratch operand']
  #allocation3 [shape = 's32[1]{0}', space=sflag, size = 0x4, scoped, tag = 'scratch operand']
  #allocation6 [shape = 's32[]', space=sflag, size = 0x4, offset = 0, fixed_abs, tag = 'sflag constant byte address 0x0 - dummy sync flag']
  %s0 = inlined_call_operand.hbm [shape: f32[1,8,128], index: 0, kind: input, shape index: {}]
  %s1 = inlined_call_operand.hbm [shape: f32[4,16,128], index: 1, kind: input, shape index: {}, may-alias: {1,2}]
  %s2 = inlined_call_operand.hbm [shape: f32[4,16,128], index: 2, kind: output, shape index: {}, may-alias: {1,2}]
  %s3 = sld [smem:[#allocation0]]
  $region10: #{prompt_learner_forward_inplace.1} parent=0
    _
  %s5 = ssub.s32 1, %s3
  %s6 = scalar_select 0, %s5, %s3
  $region1: #{prompt_learner_forward_inplace.1} parent=0
    #allocation4 [shape = 'u8[4096]{0}', space=vmem, size = 0x1000, scoped, tag = 'input window, operand 0, single buffered']
    #allocation5 [shape = 's32[1]{0}', space=sflag, size = 0x4, scoped, tag = 'scoped memory for prompt_learner_forward_inplace.1']
    %7 = vsyncpa [#allocation5], 0
    // Predicated region
    $region2: #{prompt_learner_forward_inplace.1} parent=1 // pred_check
      _
    $region3: #{prompt_learner_forward_inplace.1} parent=1 // pred_check_branch
      %9 = sbr.rel (0) target = $region5
    $region4: #{prompt_learner_forward_inplace.1} parent=1 // pred_region
      %s11 = ssub.s32 128, 128
      %12 = vsyncadd [#allocation5], %s11
      %s14 = sshll.u32 [#allocation4], 4
      %s15 = int_to_ptr.vmem [resolvable:$true] %s14
      %17 = dma.hbm_to_vmem [thread:$0]  %s0, 128, %s15, [#allocation5]
    $region5: #{prompt_learner_forward_inplace.1} parent=1 // pred_fallthru
      _
    // Predicated region
    $region6: #{prompt_learner_forward_inplace.1} parent=1 // pred_check
      _
    $region7: #{prompt_learner_forward_inplace.1} parent=1 // pred_check_branch
      %19 = sbr.rel (0) target = $region9
    $region8: #{prompt_learner_forward_inplace.1} parent=1 // pred_region
      %20 = dma.done [#allocation5], 128
    $region9: #{prompt_learner_forward_inplace.1} parent=1 // pred_fallthru
      _
    %v21 = vld [vmem:[#allocation4] sm:$0xff]
    %22 = vst [vmem:[#allocation2] sm:$0xff] %v21
    %23 = vst [vmem:[#allocation2 + $0x8] sm:$0xff] %v21
    %24 = vst [vmem:[#allocation2 + $0x10] sm:$0xff] %v21
    %25 = vst [vmem:[#allocation2 + $0x18] sm:$0xff] %v21
    %s26 = scalar_lea.hbm %s2, 16
    %s28 = sshll.u32 [#allocation2], 4
    %s29 = int_to_ptr.vmem [resolvable:$true] %s28
    %31 = dma.vmem_to_hbm [thread:$0]  %s29, 512, %s26, [#allocation3], 128, 256, 8
    %s32 = smul.u32 4, 8
    %s33 = smul.u32 %s32, 1
    %s34 = sshll.u32 %s33, 4
    %35 = dma.done [#allocation3], %s34
    %36 = vsyncpa [#allocation5], 1
  %37 = vsyncmov [#allocation3]
  %s38 = vpop.sfrf %37
  %p39 = scmp.eq.s32.totalorder %s38, 0
  %p40 = pneg %p39
  %42 = shalt.err (%p40)

</llo_original>
